<compile_context>
chip_gen: v7x
topology: tpu7x:2x2x1
jax: 0.10.0
libtpu: 0.0.40
codegen_flags: <defaults>
</compile_context>

<pallas_src>
import functools

import jax
import jax.numpy as jnp
from jax import lax
from jax.experimental import pallas as pl
from jax.experimental.pallas import tpu as pltpu


def _round_up(x, m):
    return (x + m - 1) // m * m


def _choose_tile_b(batch, n_classes, in_dtype_bytes,
                   vmem_budget_bytes=12 * 1024 * 1024):
    """Largest multiple-of-8 batch tile whose working set fits a conservative
    VMEM budget (safe on v5e/v6e 128 MiB and v7x 64 MiB without raising the
    scoped-VMEM limit)."""
    # per batch-row: 2 logit inputs x 2 pipeline buffers (input dtype)
    #                + ~6 f32 (tile_b, C) temporaries in the compute body
    bytes_per_row = n_classes * (2 * 2 * in_dtype_bytes + 6 * 4)
    tile = max(8, (vmem_budget_bytes // max(bytes_per_row, 1)) // 8 * 8)
    tile = min(tile, 512)                      # per-step overhead amortized well before this
    tile = min(tile, _round_up(batch, 8))
    return tile


def _distill_loss_kernel(s_ref, t_ref, y_ref, out_ref, *,
                         alpha, temperature, n_valid, tile_b):
    s = s_ref[...].astype(jnp.float32)          # (Bt, C) student logits (f32 math)
    t = t_ref[...].astype(jnp.float32)          # (Bt, C) teacher logits
    y = y_ref[...]                              # (Bt, 1) int32 labels
    Bt, C = s.shape

    inv_T = jnp.float32(1.0 / temperature)
    T2 = jnp.float32(temperature * temperature)
    alpha_f = jnp.float32(alpha)
    beta_f = jnp.float32(1.0 - alpha)
    inv_B = jnp.float32(1.0 / n_valid)

    # valid-row mask: handles batch padding up to a multiple of tile_b
    row_ids = pl.program_id(0) * tile_b + lax.broadcasted_iota(jnp.int32, (Bt, 1), 0)
    valid = (row_ids < n_valid).astype(jnp.float32)          # (Bt, 1)

    # ---- Cross-entropy: -log_softmax(s)[i, y_i] ----
    s_max = jnp.max(s, axis=-1, keepdims=True)
    s_sh = s - s_max
    exp_s = jnp.exp(s_sh)
    s_lse = jnp.log(jnp.sum(exp_s, axis=-1, keepdims=True))
    class_ids = lax.broadcasted_iota(jnp.int32, (Bt, C), 1)
    # pick s_sh at the label via a masked row-sum (no full 2-D onehot product sum)
    picked = jnp.sum(jnp.where(class_ids == y, s_sh, 0.0), axis=-1, keepdims=True)
    ce_rows = s_lse - picked                                  # (Bt, 1)

    # ---- KL(softmax(t/T) || softmax(s/T)), per-row sums ----
    # reuse the student shift: max(s/T) = max(s)/T  =>  sT_sh = s_sh / T
    sT_sh = s_sh * inv_T
    sT_lse = jnp.log(jnp.sum(jnp.exp(sT_sh), axis=-1, keepdims=True))
    log_q = sT_sh - sT_lse                                    # log_softmax(s/T)

    t_max = jnp.max(t, axis=-1, keepdims=True)
    tT_sh = (t - t_max) * inv_T
    exp_tT = jnp.exp(tT_sh)
    sum_tT = jnp.sum(exp_tT, axis=-1, keepdims=True)
    tT_lse = jnp.log(sum_tT)
    log_p_t = tT_sh - tT_lse                                  # log_softmax(t/T)
    p_t = exp_tT * (jnp.float32(1.0) / sum_tT)                # reuse exp_tT; no 4th exp

    kd_rows = jnp.sum(p_t * (log_p_t - log_q), axis=-1, keepdims=True)  # (Bt, 1)

    # ---- fused per-tile partial: alpha*CE/B + (1-alpha)*T^2*KL/B ----
    loss_rows = alpha_f * ce_rows + beta_f * T2 * kd_rows
    partial = jnp.sum(loss_rows * valid, axis=0, keepdims=True) * inv_B  # (1, 1)

    # lane-dense unmasked store of this tile's partial into its own block
    out_ref[...] = jnp.broadcast_to(partial, (8, 128))


def distillation_loss(s_logit, t_logit, y, *, alpha, temperature, tile_b=None):
    """s_logit, t_logit: (B, C) float (f32 or bf16); y: (B,) int labels.
    Returns scalar f32 loss matching the PyTorch DistillationLoss forward."""
    B, C = s_logit.shape
    in_bytes = jnp.dtype(s_logit.dtype).itemsize
    if tile_b is None:
        tile_b = _choose_tile_b(B, C, in_bytes)
    B_pad = _round_up(B, tile_b)
    num_tiles = B_pad // tile_b

    if B_pad != B:
        pad = B_pad - B
        s_logit = jnp.pad(s_logit, ((0, pad), (0, 0)))
        t_logit = jnp.pad(t_logit, ((0, pad), (0, 0)))
        y = jnp.pad(y, ((0, pad),))
    y2d = y.astype(jnp.int32).reshape(B_pad, 1)

    kernel = functools.partial(
        _distill_loss_kernel,
        alpha=float(alpha),
        temperature=float(temperature),
        n_valid=B,
        tile_b=tile_b,
    )

    out = pl.pallas_call(
        kernel,
        out_shape=jax.ShapeDtypeStruct((num_tiles * 8, 128), jnp.float32),
        grid=(num_tiles,),
        in_specs=[
            pl.BlockSpec((tile_b, C), lambda i: (i, 0)),
            pl.BlockSpec((tile_b, C), lambda i: (i, 0)),
            pl.BlockSpec((tile_b, 1), lambda i: (i, 0)),
        ],
        out_specs=pl.BlockSpec((8, 128), lambda i: (i, 0)),
        compiler_params=pltpu.CompilerParams(
            dimension_semantics=("parallel",),   # per-tile partials -> both v7x TCs
        ),
    )(s_logit, t_logit, y2d)

    # sum the per-tile partials (one value per (8,128) block, at row 8*i, lane 0)
    return jnp.sum(out[::8, 0])


def _reference(s, t, y, alpha, T):
    # Pure-JAX reference mirroring the PyTorch module.
    log_p_s = jax.nn.log_softmax(s, axis=1)
    ce = -jnp.mean(jnp.take_along_axis(log_p_s, y[:, None], axis=1))
    log_q = jax.nn.log_softmax(s / T, axis=1)
    p_t = jax.nn.softmax(t / T, axis=1)
    kd = jnp.sum(p_t * (jnp.log(p_t) - log_q)) / s.shape[0] * T * T
    return alpha * ce + (1 - alpha) * kd


if __name__ == "__main__":
    alpha, temperature = 0.5, 4.0
    key = jax.random.PRNGKey(0)
    k1, k2, k3, k4, k5 = jax.random.split(key, 5)

    # Case 1: small f32 logits, single tile.
    B, C = 8, 32
    s32 = jax.random.normal(k1, (B, C), dtype=jnp.float32)
    t32 = jax.random.normal(k2, (B, C), dtype=jnp.float32)
    y = jax.random.randint(k3, (B,), 0, C, dtype=jnp.int32)

    loss = distillation_loss(s32, t32, y, alpha=alpha, temperature=temperature)
    loss = jax.block_until_ready(loss)
    ref = _reference(s32, t32, y, alpha, temperature)
    assert jnp.allclose(loss, ref, rtol=1e-5, atol=1e-5), (loss, ref)

    # Case 2: bf16 logits (halved HBM traffic), B not a multiple of the tile,
    # multiple grid tiles (forced tile_b=8) -> exercises padding mask + parallel grid.
    B2, C2 = 20, 128
    s16 = jax.random.normal(k4, (B2, C2), dtype=jnp.float32).astype(jnp.bfloat16)
    t16 = jax.random.normal(k5, (B2, C2), dtype=jnp.float32).astype(jnp.bfloat16)
    y2 = jax.random.randint(k3, (B2,), 0, C2, dtype=jnp.int32)

    loss2 = distillation_loss(s16, t16, y2, alpha=alpha, temperature=temperature, tile_b=8)
    loss2 = jax.block_until_ready(loss2)
    ref2 = _reference(s16.astype(jnp.float32), t16.astype(jnp.float32), y2, alpha, temperature)
    assert jnp.allclose(loss2, ref2, rtol=1e-4, atol=1e-4), (loss2, ref2)

    print("KERNEL_OK")
</pallas_src>

<mosaic_0001>
module attributes {stable_mosaic.version = 11 : i64} {
  func.func @_distill_loss_kernel(%arg0: i32, %arg1: memref<8x32xf32, #tpu.memory_space<vmem>>, %arg2: memref<8x32xf32, #tpu.memory_space<vmem>>, %arg3: memref<8x1xi32, #tpu.memory_space<vmem>>, %arg4: memref<8x128xf32, #tpu.memory_space<vmem>>) attributes {dimension_semantics = [#tpu.dimension_semantics<parallel>], iteration_bounds = array<i64: 1>, scalar_prefetch = 0 : i64, scratch_operands = 0 : i64, tpu.core_type = #tpu.core_type<tc>, window_params = [{transform_indices = @transform_0, window_bounds = array<i64: 8, 32>}, {transform_indices = @transform_1, window_bounds = array<i64: 8, 32>}, {transform_indices = @transform_2, window_bounds = array<i64: 8, 1>}, {transform_indices = @transform_3, window_bounds = array<i64: 8, 128>}]} {
    %c0 = arith.constant 0 : index
    %c0_0 = arith.constant 0 : index
    %0 = vector.load %arg1[%c0, %c0_0] : memref<8x32xf32, #tpu.memory_space<vmem>>, vector<8x32xf32>
    %c0_1 = arith.constant 0 : index
    %c0_2 = arith.constant 0 : index
    %1 = vector.load %arg2[%c0_1, %c0_2] : memref<8x32xf32, #tpu.memory_space<vmem>>, vector<8x32xf32>
    %c0_3 = arith.constant 0 : index
    %c0_4 = arith.constant 0 : index
    %2 = vector.load %arg3[%c0_3, %c0_4] : memref<8x1xi32, #tpu.memory_space<vmem>>, vector<8x1xi32>
    %c8_i32 = arith.constant 8 : i32
    %3 = arith.muli %arg0, %c8_i32 : i32
    %4 = tpu.iota {dimensions = array<i32: 0>} : vector<8x1xi32>
    %5 = vector.broadcast %3 : i32 to vector<8x1xi32>
    %6 = arith.addi %5, %4 : vector<8x1xi32>
    %c8_i32_5 = arith.constant 8 : i32
    %7 = vector.broadcast %c8_i32_5 : i32 to vector<8x1xi32>
    %8 = arith.cmpi slt, %6, %7 : vector<8x1xi32>
    %9 = arith.extui %8 : vector<8x1xi1> to vector<8x1xi32>
    %10 = arith.sitofp %9 : vector<8x1xi32> to vector<8x1xf32>
    %cst = arith.constant dense<0xFF800000> : vector<8xf32>
    %11 = vector.multi_reduction <maximumf>, %0, %cst [1] : vector<8x32xf32> to vector<8xf32>
    %12 = vector.shape_cast %11 : vector<8xf32> to vector<8x1xf32>
    %13 = vector.broadcast %12 : vector<8x1xf32> to vector<8x32xf32>
    %14 = arith.subf %0, %13 : vector<8x32xf32>
    %15 = math.exp %14 : vector<8x32xf32>
    %cst_6 = arith.constant dense<0.000000e+00> : vector<8xf32>
    %16 = vector.multi_reduction <add>, %15, %cst_6 [1] : vector<8x32xf32> to vector<8xf32>
    %17 = vector.shape_cast %16 : vector<8xf32> to vector<8x1xf32>
    %18 = math.log %17 : vector<8x1xf32>
    %19 = tpu.iota {dimensions = array<i32: 1>} : vector<8x32xi32>
    %20 = vector.broadcast %2 : vector<8x1xi32> to vector<8x32xi32>
    %21 = arith.cmpi eq, %19, %20 : vector<8x32xi32>
    %cst_7 = arith.constant 0.000000e+00 : f32
    %22 = vector.broadcast %cst_7 : f32 to vector<8x32xf32>
    %23 = arith.select %21, %14, %22 : vector<8x32xi1>, vector<8x32xf32>
    %cst_8 = arith.constant dense<0.000000e+00> : vector<8xf32>
    %24 = vector.multi_reduction <add>, %23, %cst_8 [1] : vector<8x32xf32> to vector<8xf32>
    %25 = vector.shape_cast %24 : vector<8xf32> to vector<8x1xf32>
    %26 = arith.subf %18, %25 : vector<8x1xf32>
    %cst_9 = arith.constant 2.500000e-01 : f32
    %27 = vector.broadcast %cst_9 : f32 to vector<8x32xf32>
    %28 = arith.mulf %14, %27 : vector<8x32xf32>
    %29 = math.exp %28 : vector<8x32xf32>
    %cst_10 = arith.constant dense<0.000000e+00> : vector<8xf32>
    %30 = vector.multi_reduction <add>, %29, %cst_10 [1] : vector<8x32xf32> to vector<8xf32>
    %31 = vector.shape_cast %30 : vector<8xf32> to vector<8x1xf32>
    %32 = math.log %31 : vector<8x1xf32>
    %33 = vector.broadcast %32 : vector<8x1xf32> to vector<8x32xf32>
    %34 = arith.subf %28, %33 : vector<8x32xf32>
    %cst_11 = arith.constant dense<0xFF800000> : vector<8xf32>
    %35 = vector.multi_reduction <maximumf>, %1, %cst_11 [1] : vector<8x32xf32> to vector<8xf32>
    %36 = vector.shape_cast %35 : vector<8xf32> to vector<8x1xf32>
    %37 = vector.broadcast %36 : vector<8x1xf32> to vector<8x32xf32>
    %38 = arith.subf %1, %37 : vector<8x32xf32>
    %cst_12 = arith.constant 2.500000e-01 : f32
    %39 = vector.broadcast %cst_12 : f32 to vector<8x32xf32>
    %40 = arith.mulf %38, %39 : vector<8x32xf32>
    %41 = math.exp %40 : vector<8x32xf32>
    %cst_13 = arith.constant dense<0.000000e+00> : vector<8xf32>
    %42 = vector.multi_reduction <add>, %41, %cst_13 [1] : vector<8x32xf32> to vector<8xf32>
    %43 = vector.shape_cast %42 : vector<8xf32> to vector<8x1xf32>
    %44 = math.log %43 : vector<8x1xf32>
    %45 = vector.broadcast %44 : vector<8x1xf32> to vector<8x32xf32>
    %46 = arith.subf %40, %45 : vector<8x32xf32>
    %cst_14 = arith.constant 1.000000e+00 : f32
    %47 = vector.broadcast %cst_14 : f32 to vector<8x1xf32>
    %48 = arith.divf %47, %43 : vector<8x1xf32>
    %49 = vector.broadcast %48 : vector<8x1xf32> to vector<8x32xf32>
    %50 = arith.mulf %41, %49 : vector<8x32xf32>
    %51 = arith.subf %46, %34 : vector<8x32xf32>
    %52 = arith.mulf %50, %51 : vector<8x32xf32>
    %cst_15 = arith.constant dense<0.000000e+00> : vector<8xf32>
    %53 = vector.multi_reduction <add>, %52, %cst_15 [1] : vector<8x32xf32> to vector<8xf32>
    %54 = vector.shape_cast %53 : vector<8xf32> to vector<8x1xf32>
    %cst_16 = arith.constant 5.000000e-01 : f32
    %55 = vector.broadcast %cst_16 : f32 to vector<8x1xf32>
    %56 = arith.mulf %55, %26 : vector<8x1xf32>
    %cst_17 = arith.constant 5.000000e-01 : f32
    %cst_18 = arith.constant 1.600000e+01 : f32
    %57 = arith.mulf %cst_17, %cst_18 : f32
    %58 = vector.broadcast %57 : f32 to vector<8x1xf32>
    %59 = arith.mulf %58, %54 : vector<8x1xf32>
    %60 = arith.addf %56, %59 : vector<8x1xf32>
    %61 = arith.mulf %60, %10 : vector<8x1xf32>
    %cst_19 = arith.constant dense<0.000000e+00> : vector<1xf32>
    %62 = vector.multi_reduction <add>, %61, %cst_19 [0] : vector<8x1xf32> to vector<1xf32>
    %63 = vector.shape_cast %62 : vector<1xf32> to vector<1x1xf32>
    %cst_20 = arith.constant 1.250000e-01 : f32
    %64 = vector.broadcast %cst_20 : f32 to vector<1x1xf32>
    %65 = arith.mulf %63, %64 : vector<1x1xf32>
    %66 = vector.shape_cast %65 : vector<1x1xf32> to vector<1x1xf32>
    %67 = vector.broadcast %66 : vector<1x1xf32> to vector<8x128xf32>
    %c0_21 = arith.constant 0 : index
    %c0_22 = arith.constant 0 : index
    %68 = vector.load %arg4[%c0_21, %c0_22] : memref<8x128xf32, #tpu.memory_space<vmem>>, vector<8x128xf32>
    tpu.vector_store %arg4[%c0_21, %c0_22], %67 {strides = array<i32>} : memref<8x128xf32, #tpu.memory_space<vmem>>, vector<8x128xf32>,
    return
  }
  func.func @transform_0(%arg0: i32) -> (i32, i32) {
    %c0_i32 = arith.constant 0 : i32
    %c0_i32_0 = arith.constant 0 : i32
    return %arg0, %c0_i32 : i32, i32
  }
  func.func @transform_1(%arg0: i32) -> (i32, i32) {
    %c0_i32 = arith.constant 0 : i32
    %c0_i32_0 = arith.constant 0 : i32
    return %arg0, %c0_i32 : i32, i32
  }
  func.func @transform_2(%arg0: i32) -> (i32, i32) {
    %c0_i32 = arith.constant 0 : i32
    %c0_i32_0 = arith.constant 0 : i32
    return %arg0, %c0_i32 : i32, i32
  }
  func.func @transform_3(%arg0: i32) -> (i32, i32) {
    %c0_i32 = arith.constant 0 : i32
    %c0_i32_0 = arith.constant 0 : i32
    return %arg0, %c0_i32 : i32, i32
  }
}

</mosaic_0001>

<llo_original>
// kernel: tpu_custom_call.1
$region0: #{tpu_custom_call.1}
  #allocation0 [shape = 'u32[]', space=smem, size = 0x4, offset = 0x4, fixed_abs, tag = 'smem constant byte address 0x4 - core index']
  #allocation1 [shape = 'u32[144,128]{1,0:T(1,128)}', space=vmem, size = 0x12000, scoped, tag = 'internal scratch']
  %s0 = inlined_call_operand.vmem [shape: f32[8,32], index: 0, kind: input, shape index: {}]
  %s1 = inlined_call_operand.hbm [shape: f32[8,32], index: 1, kind: input, shape index: {}]
  %s2 = inlined_call_operand.vmem [shape: s32[8,1], index: 2, kind: input, shape index: {}]
  %s3 = inlined_call_operand.hbm [shape: f32[8,128], index: 3, kind: output, shape index: {}]
  %s4 = sld [smem:[#allocation0]]
  $region26: #{tpu_custom_call.1} parent=0
    _
  %s6 = ssub.s32 1, %s4
  %s7 = scalar_select 0, %s6, %s4
  $region1: #{tpu_custom_call.1} parent=0
    #allocation2 [shape = 'u8[4096]{0}', space=vmem, size = 0x1000, scoped, tag = 'input window, operand 1, single buffered']
    #allocation3 [shape = 's32[1]{0}', space=sflag, size = 0x4, scoped, tag = 'scoped memory for tpu_custom_call.1']
    #allocation4 [shape = 's32[1]{0}', space=sflag, size = 0x4, scoped, tag = 'scoped memory for tpu_custom_call.1']
    #allocation5 [shape = 'u8[4096]{0}', space=vmem, size = 0x1000, scoped, tag = 'output window, operand 0, single buffered']
    %8 = vsyncpa [#allocation3], 0
    %9 = vsyncpa [#allocation4], 0
    // Predicated region
    $region2: #{tpu_custom_call.1} parent=1 // pred_check
      _
    $region3: #{tpu_custom_call.1} parent=1 // pred_check_branch
      %11 = sbr.rel (0) target = $region5
    $region4: #{tpu_custom_call.1} parent=1 // pred_region
      _
    $region5: #{tpu_custom_call.1} parent=1 // pred_fallthru
      _
    // Predicated region
    $region6: #{tpu_custom_call.1} parent=1 // pred_check
      _
    $region7: #{tpu_custom_call.1} parent=1 // pred_check_branch
      %13 = sbr.rel (0) target = $region9
    $region8: #{tpu_custom_call.1} parent=1 // pred_region
      %s15 = ssub.s32 128, 128
      %16 = vsyncadd [#allocation3], %s15
      %s18 = sshll.u32 [#allocation2], 4
      %s19 = int_to_ptr.vmem [resolvable:$true] %s18
      %21 = dma.hbm_to_vmem [thread:$0]  %s1, 128, %s19, [#allocation3]
    $region9: #{tpu_custom_call.1} parent=1 // pred_fallthru
      _
    // Predicated region
    $region10: #{tpu_custom_call.1} parent=1 // pred_check
      _
    $region11: #{tpu_custom_call.1} parent=1 // pred_check_branch
      %23 = sbr.rel (0) target = $region13
    $region12: #{tpu_custom_call.1} parent=1 // pred_region
      _
    $region13: #{tpu_custom_call.1} parent=1 // pred_fallthru
      _
    // Predicated region
    $region14: #{tpu_custom_call.1} parent=1 // pred_check
      _
    $region15: #{tpu_custom_call.1} parent=1 // pred_check_branch
      %25 = sbr.rel (0) target = $region17
    $region16: #{tpu_custom_call.1} parent=1 // pred_region
      %26 = dma.done [#allocation3], 128
    $region17: #{tpu_custom_call.1} parent=1 // pred_fallthru
      _
    %v27 = vld [vmem:[%s0] sm:$0xff]
    %v28 = vld [vmem:[#allocation2] sm:$0xff]
    %v29 = vld [vmem:[%s2] sm:$0xff]
    %s30 = smul.u32 0, 8
    %v31 = vlaneseq
    %v32 = vshrl.u32 %v31, 7
    %v33 = vstv %s30
    %v34 = vadd.s32 %v33, %v32
    %vm35 = vcmp.lt.s32.totalorder %v34, 8
    %v36 = vsel %vm35, 1, 0
    %v37 = vcvt.s32.f32 %v36
    %vm38 = vcmask 261120
    %v39 = vsel %vm38, %v27, -inf
    %40 = vmax.xlane.f32.xlu0 %v39
    %v41 = vpop.xlane.xlu0 %40
    %v42 = vsub.f32 %v27, %v41
    %v43 = vmul.f32 %v42, 1.442695
    %v44 = vpow.pop %v43
    %v45 = vsel %vm38, %v44, 0.0
    %46 = vadd.xlane.f32.xlu0 %v45
    %v47 = vpop.xlane.xlu0 %46
    %v48 = vlog2.pop %v47
    %v49 = vmul.f32 %v48, 0.6931472
    %v50 = vlaneseq
    %v51 = vand.u32 %v50, 127
    %52 = vset.pattern.permute.xlu0 0
    %53 = vperm.xlu0 %52, %v29
    %v54 = vpop.permute.xlu0 %53
    %vm55 = vcmp.eq.s32.totalorder %v51, %v54
    %v56 = vsel %vm55, %v42, 0.0
    %v57 = vsel %vm38, %v56, 0.0
    %58 = vadd.xlane.f32.xlu0 %v57
    %v59 = vpop.xlane.xlu0 %58
    %v60 = vsub.f32 %v49, %v59
    %v61 = vmul.f32 %v42, 0.25
    %v62 = vmul.f32 %v61, 1.442695
    %v63 = vpow.pop %v62
    %v64 = vsel %vm38, %v63, 0.0
    %65 = vadd.xlane.f32.xlu0 %v64
    %v66 = vpop.xlane.xlu0 %65
    %v67 = vlog2.pop %v66
    %v68 = vmul.f32 %v67, 0.6931472
    %v69 = vsub.f32 %v61, %v68
    %v70 = vsel %vm38, %v28, -inf
    %71 = vmax.xlane.f32.xlu0 %v70
    %v72 = vpop.xlane.xlu0 %71
    %v73 = vsub.f32 %v28, %v72
    %v74 = vmul.f32 %v73, 0.25
    %v75 = vmul.f32 %v74, 1.442695
    %v76 = vpow.pop %v75
    %v77 = vsel %vm38, %v76, 0.0
    %78 = vadd.xlane.f32.xlu0 %v77
    %v79 = vpop.xlane.xlu0 %78
    %v80 = vlog2.pop %v79
    %v81 = vmul.f32 %v80, 0.6931472
    %v82 = vsub.f32 %v74, %v81
    %v83 = vrcp.pop %v79
    %v84 = vmul.f32 1.0, %v83
    %v85 = vmul.f32 %v76, %v84
    %v86 = vsub.f32 %v82, %v69
    %v87 = vmul.f32 %v85, %v86
    %v88 = vsel %vm38, %v87, 0.0
    %89 = vadd.xlane.f32.xlu0 %v88
    %v90 = vpop.xlane.xlu0 %89
    %v91 = vmul.f32 %v60, 0.5
    %v92 = vmul.f32 %v90, 8.0
    %v93 = vadd.f32 %v91, %v92
    %v94 = vmul.f32 %v93, %v37
    %v95 = vrot.slane %v94, 4
    %v96 = vadd.f32 %v94, %v95
    %v97 = vrot.slane %v96, 2
    %v98 = vadd.f32 %v96, %v97
    %v99 = vrot.slane %v98, 1
    %v100 = vadd.f32 %v98, %v99
    %v101 = vmul.f32 %v100, 0.125
    %102 = vst [vmem:[#allocation5] sm:$0xff] %v101
    // Predicated region
    $region18: #{tpu_custom_call.1} parent=1 // pred_check
      _
    $region19: #{tpu_custom_call.1} parent=1 // pred_check_branch
      %104 = sbr.rel (0) target = $region21
    $region20: #{tpu_custom_call.1} parent=1 // pred_region
      %s106 = ssub.s32 128, 128
      %107 = vsyncadd [#allocation4], %s106
      %s109 = sshll.u32 [#allocation5], 4
      %s110 = int_to_ptr.vmem [resolvable:$true] %s109
      %112 = dma.vmem_to_hbm [thread:$0]  %s110, 128, %s3, [#allocation4]
    $region21: #{tpu_custom_call.1} parent=1 // pred_fallthru
      _
    // Predicated region
    $region22: #{tpu_custom_call.1} parent=1 // pred_check
      _
    $region23: #{tpu_custom_call.1} parent=1 // pred_check_branch
      %114 = sbr.rel (0) target = $region25
    $region24: #{tpu_custom_call.1} parent=1 // pred_region
      %115 = dma.done [#allocation4], 128
    $region25: #{tpu_custom_call.1} parent=1 // pred_fallthru
      _
    %116 = vsyncpa [#allocation3], 1
    %117 = vsyncpa [#allocation4], 1

</llo_original>
